<compile_context>
chip_gen: v7x
topology: tpu7x:2x2x1
jax: 0.10.0
libtpu: 0.0.40
codegen_flags: <defaults>
</compile_context>

<pallas_src>
import math

import jax
import jax.numpy as jnp
from jax import lax
from jax.experimental import pallas as pl
from jax.experimental.pallas import tpu as pltpu

_LANE = 128
_MAX_BN_ALIGNED = 16    # batches per block on the lane-aligned path
_MAX_BN_PACKED = 32     # batches per block on ragged/small paths (8|16|32 divide 32)
_CHUNK_F32_BYTES = 128 * 1024  # target f32 footprint handled per inner-loop chunk


def _round_up(x: int, m: int) -> int:
    return (x + m - 1) // m * m


def _vmem_budget():
    """(per-input-block byte target, scoped-VMEM limit) — generation aware."""
    vmem_cap = 128 << 20
    try:  # v7x reports 64 MiB per TensorCore; v5e/v6e report 128 MiB.
        vmem_cap = int(pltpu.get_tpu_info().vmem_capacity_bytes)
    except Exception:
        pass
    if vmem_cap <= (64 << 20):
        return 16 << 20, 48 << 20   # v7x: biggest blocks despite smallest VMEM
    return 8 << 20, 48 << 20        # v5e / v6e


# --------------------------------------------------------------------------
# Path A: feature size is a multiple of 128 -> free (N, rows, 128) view.
# --------------------------------------------------------------------------
def _make_aligned_kernel(*, bn, rows, row_tile, chunk_rows, k_half, need_mask,
                         acc_dtype):
    n_chunks = row_tile // chunk_rows
    groups = chunk_rows // 8

    def kernel(x_ref, o_ref, acc_ref):
        k = pl.program_id(2)

        @pl.when(k == 0)
        def _init():
            acc_ref[...] = jnp.zeros_like(acc_ref)

        # Global row of the first row of this block (intended, pre-clamp).
        base = (pl.program_id(0) * k_half + k) * row_tile
        if need_mask:
            rid = lax.broadcasted_iota(jnp.int32, (bn, 8, _LANE), 1)

        def chunk_body(c, carry):
            off = c * chunk_rows
            parts = [None, None, None, None]
            for g in range(groups):
                r0 = pl.multiple_of(off + g * 8, 8)
                v = x_ref[:, pl.ds(r0, 8), :].astype(acc_dtype)   # (bn, 8, 128)
                if need_mask:
                    v = jnp.where(rid + (base + off + g * 8) < rows, v, 0)
                slot = g & 3
                parts[slot] = v if parts[slot] is None else parts[slot] + v
            total = acc_ref[...]
            for p in parts:
                if p is not None:
                    total = total + p
            acc_ref[...] = total
            return carry

        lax.fori_loop(0, n_chunks, chunk_body, 0, unroll=n_chunks <= 4)

        @pl.when(k == k_half - 1)
        def _finalize():
            # Single deferred cross-lane/sublane reduce per batch.
            for b in range(bn):
                o_ref[0, b] = jnp.sum(acc_ref[b]).astype(o_ref.dtype)

    return kernel


def _sum_lane_aligned(x2, n, d, itemsize, sub, block_bytes, vmem_limit,
                      acc_dtype, out_dtype):
    rows = d // _LANE
    x3 = x2.reshape(n, rows, _LANE)            # free for contiguous input

    row_bytes = rows * _LANE * itemsize
    bn = max(1, min(n, _MAX_BN_ALIGNED, block_bytes // max(row_bytes, 1)))

    # Inner-chunk rows: multiple of the packed sublane count, never above the
    # per-batch row count, bounded so per-group temps stay tiny.
    chunk_rows = max(sub, min(512, (_CHUNK_F32_BYTES // (bn * _LANE * 4)) // sub * sub))
    chunk_rows = min(chunk_rows, (rows // sub) * sub)

    cap_rows = max(chunk_rows,
                   (block_bytes // (bn * _LANE * itemsize)) // chunk_rows * chunk_rows)
    if rows <= cap_rows:
        row_tile = _round_up(rows, chunk_rows)
    else:
        kt = pl.cdiv(rows, cap_rows)
        row_tile = _round_up(pl.cdiv(rows, kt), chunk_rows)   # balanced tiling
    row_tile = min(row_tile, (rows // chunk_rows) * chunk_rows)
    k_total = pl.cdiv(rows, row_tile)

    n_blocks = pl.cdiv(n, bn)
    n_pad = n_blocks * bn
    # Split the reduction across a leading parallel axis when the batch axis
    # alone cannot balance the two v7x TensorCores (no-op on 1-core chips).
    n_split = 2 if (k_total >= 2 and n_blocks % 2 == 1) else 1
    k_half = pl.cdiv(k_total, n_split)
    need_mask = (rows % row_tile != 0) or (n_split * k_half != k_total)

    kernel = _make_aligned_kernel(bn=bn, rows=rows, row_tile=row_tile,
                                  chunk_rows=chunk_rows, k_half=k_half,
                                  need_mask=need_mask, acc_dtype=acc_dtype)

    partials = pl.pallas_call(
        kernel,
        out_shape=jax.ShapeDtypeStruct((n_split, n_pad), acc_dtype),
        grid_spec=pltpu.PrefetchScalarGridSpec(
            num_scalar_prefetch=0,
            grid=(n_split, n_blocks, k_half),
            in_specs=[pl.BlockSpec(
                (bn, row_tile, _LANE),
                lambda s, i, k: (i, jnp.minimum(s * k_half + k, k_total - 1), 0))],
            out_specs=pl.BlockSpec((1, bn), lambda s, i, k: (s, i),
                                   memory_space=pltpu.SMEM),
            scratch_shapes=[pltpu.VMEM((bn, 8, _LANE), acc_dtype)],
        ),
        compiler_params=pltpu.CompilerParams(
            dimension_semantics=("parallel", "parallel", "arbitrary"),
            vmem_limit_bytes=vmem_limit),
        cost_estimate=pl.CostEstimate(
            flops=n * d, transcendentals=0,
            bytes_accessed=n * d * itemsize + n_split * n_pad * 4),
    )(x3)

    out = partials[0] if n_split == 1 else jnp.sum(partials, axis=0)
    return out[:n].astype(out_dtype)


# --------------------------------------------------------------------------
# Path B: d % 128 != 0 (and d large enough) -> keep the (N, d) layout and mask
# the lane tail in-kernel; batches ride the sublane axis.
# --------------------------------------------------------------------------
def _make_ragged_kernel(*, bn, d, ct, chunk_units, k_half, acc_dtype):
    chunk_cols = chunk_units * _LANE
    n_chunks = ct // chunk_cols

    def kernel(x_ref, o_ref, acc_ref):
        k = pl.program_id(2)

        @pl.when(k == 0)
        def _init():
            acc_ref[...] = jnp.zeros_like(acc_ref)

        col0 = (pl.program_id(0) * k_half + k) * ct   # intended (pre-clamp) column
        lane = lax.broadcasted_iota(jnp.int32, (bn, _LANE), 1)

        def accumulate(off, masked):
            parts = [None, None, None, None]
            for j in range(chunk_units):
                c0 = pl.multiple_of(off + j * _LANE, _LANE)
                v = x_ref[:, pl.ds(c0, _LANE)].astype(acc_dtype)   # (bn, 128)
                if masked:
                    v = jnp.where(lane + (col0 + off + j * _LANE) < d, v, 0)
                slot = j & 3
                parts[slot] = v if parts[slot] is None else parts[slot] + v
            total = acc_ref[...]
            for p in parts:
                if p is not None:
                    total = total + p
            acc_ref[...] = total

        def chunk_body(c, carry):
            off = c * chunk_cols
            end = col0 + off + chunk_cols

            @pl.when(end <= d)      # steady state: no per-lane masking
            def _full():
                accumulate(off, masked=False)

            @pl.when(end > d)       # edge chunk: mask the lane tail / overshoot
            def _edge():
                accumulate(off, masked=True)

            return carry

        lax.fori_loop(0, n_chunks, chunk_body, 0, unroll=n_chunks <= 4)

        @pl.when(k == k_half - 1)
        def _finalize():
            for b in range(bn):
                o_ref[0, b] = jnp.sum(acc_ref[pl.ds(b, 1), :]).astype(o_ref.dtype)

    return kernel


def _sum_ragged(x2, n, d, itemsize, block_bytes, vmem_limit, acc_dtype, out_dtype):
    # TODO(synk): with N < 8 and ragged d the sublanes are under-filled; a
    # relayout-based variant could recover the last ~2x of VPU efficiency.
    bn = n if n <= _MAX_BN_PACKED else _MAX_BN_PACKED
    units_floor = d // _LANE                    # >= 8 (routing guarantees it)
    chunk_units = max(1, min(32, units_floor, _CHUNK_F32_BYTES // (bn * _LANE * 4)))
    unit_cap = max(chunk_units,
                   (block_bytes // (bn * _LANE * itemsize)) // chunk_units * chunk_units)
    if units_floor <= unit_cap:
        ct_units = (units_floor // chunk_units) * chunk_units
    else:
        kt = pl.cdiv(units_floor, unit_cap)
        ct_units = _round_up(pl.cdiv(units_floor, kt), chunk_units)  # balanced
    ct_units = min(ct_units, (units_floor // chunk_units) * chunk_units)
    ct = ct_units * _LANE
    k_total = pl.cdiv(d, ct)

    n_blocks = pl.cdiv(n, bn)
    n_pad = n_blocks * bn
    n_split = 2 if (k_total >= 2 and n_blocks % 2 == 1) else 1
    k_half = pl.cdiv(k_total, n_split)

    kernel = _make_ragged_kernel(bn=bn, d=d, ct=ct, chunk_units=chunk_units,
                                 k_half=k_half, acc_dtype=acc_dtype)

    partials = pl.pallas_call(
        kernel,
        out_shape=jax.ShapeDtypeStruct((n_split, n_pad), acc_dtype),
        grid_spec=pltpu.PrefetchScalarGridSpec(
            num_scalar_prefetch=0,
            grid=(n_split, n_blocks, k_half),
            in_specs=[pl.BlockSpec(
                (bn, ct),
                lambda s, i, k: (i, jnp.minimum(s * k_half + k, k_total - 1)))],
            out_specs=pl.BlockSpec((1, bn), lambda s, i, k: (s, i),
                                   memory_space=pltpu.SMEM),
            scratch_shapes=[pltpu.VMEM((bn, _LANE), acc_dtype)],
        ),
        compiler_params=pltpu.CompilerParams(
            dimension_semantics=("parallel", "parallel", "arbitrary"),
            vmem_limit_bytes=vmem_limit),
        cost_estimate=pl.CostEstimate(
            flops=n * d, transcendentals=0,
            bytes_accessed=n * d * itemsize + n_split * n_pad * 4),
    )(x2)

    out = partials[0] if n_split == 1 else jnp.sum(partials, axis=0)
    return out[:n].astype(out_dtype)


# --------------------------------------------------------------------------
# Path C: tiny feature size (< one (sub, 128) tile per batch).
# --------------------------------------------------------------------------
def _sum_small(x2, n, d, itemsize, vmem_limit, acc_dtype, out_dtype):
    # TODO(synk): for huge N with tiny D this stays per-step-overhead bound.
    bn = n if n <= _MAX_BN_PACKED else _MAX_BN_PACKED
    n_blocks = pl.cdiv(n, bn)
    n_pad = n_blocks * bn

    def kernel(x_ref, o_ref):
        for b in range(bn):
            o_ref[b] = jnp.sum(
                x_ref[pl.ds(b, 1), :].astype(acc_dtype)).astype(o_ref.dtype)

    out = pl.pallas_call(
        kernel,
        out_shape=jax.ShapeDtypeStruct((n_pad,), acc_dtype),
        grid_spec=pltpu.PrefetchScalarGridSpec(
            num_scalar_prefetch=0,
            grid=(n_blocks,),
            in_specs=[pl.BlockSpec((bn, d), lambda i: (i, 0))],
            out_specs=pl.BlockSpec((bn,), lambda i: (i,),
                                   memory_space=pltpu.SMEM),
        ),
        compiler_params=pltpu.CompilerParams(
            dimension_semantics=("parallel",), vmem_limit_bytes=vmem_limit),
        cost_estimate=pl.CostEstimate(flops=n * d, transcendentals=0,
                                      bytes_accessed=n * d * itemsize + n_pad * 4),
    )(x2)
    return out[:n].astype(out_dtype)


# --------------------------------------------------------------------------
def sum_all(x: jax.Array, *, force_pallas: bool = False) -> jax.Array:
    """Pallas equivalent of `input.sum(dim=[1, 2, 3])` for NCHW input."""
    n = x.shape[0]
    d = math.prod(x.shape[1:]) if x.ndim > 1 else 1
    inexact = jnp.issubdtype(x.dtype, jnp.inexact)
    out_dtype = x.dtype if inexact else jnp.int32
    acc_dtype = jnp.float32 if inexact else jnp.int32

    if n == 0 or d == 0:
        return jnp.zeros((n,), out_dtype)
    if not force_pallas and n * d < (1 << 16):
        # Launch/step overhead dominates tiny reductions; let XLA fuse it.
        return jnp.sum(x.reshape(n, d).astype(acc_dtype), axis=1).astype(out_dtype)

    itemsize = jnp.dtype(x.dtype).itemsize
    sub = 8 * max(1, 4 // itemsize)           # packed sublane multiple: 8/16/32
    block_bytes, vmem_limit = _vmem_budget()
    x2 = x.reshape(n, d)                      # free for contiguous input

    if d < sub * _LANE:
        return _sum_small(x2, n, d, itemsize, vmem_limit, acc_dtype, out_dtype)
    if d % _LANE == 0:
        return _sum_lane_aligned(x2, n, d, itemsize, sub, block_bytes,
                                 vmem_limit, acc_dtype, out_dtype)
    return _sum_ragged(x2, n, d, itemsize, block_bytes, vmem_limit,
                       acc_dtype, out_dtype)


if __name__ == "__main__":
    key = jax.random.PRNGKey(0)

    # Small NCHW shape consistent with the module: sum over (C, H, W).
    N, C, H, W = 2, 4, 16, 16
    x = jax.random.normal(key, (N, C, H, W), dtype=jnp.float32)

    out = jax.block_until_ready(sum_all(x, force_pallas=True))
    ref = jnp.sum(x, axis=(1, 2, 3))
    assert out.shape == (N,) and out.dtype == x.dtype
    assert jnp.allclose(out, ref, rtol=1e-5, atol=1e-4)

    # Ragged feature size (C*H*W = 1105, not a multiple of 128): masked path,
    # also exercises the 2-way reduction split.
    k1, k2 = jax.random.split(key)
    x_rag = jax.random.normal(k1, (2, 5, 17, 13), dtype=jnp.float32)
    out_rag = jax.block_until_ready(sum_all(x_rag, force_pallas=True))
    assert jnp.allclose(out_rag, jnp.sum(x_rag, axis=(1, 2, 3)), rtol=1e-5, atol=1e-4)

    # Tiny feature size (C*H*W = 105 < 128): batch-packed small path.
    x_small = jax.random.normal(k2, (2, 3, 7, 5), dtype=jnp.float32)
    out_small = jax.block_until_ready(sum_all(x_small, force_pallas=True))
    assert jnp.allclose(out_small, jnp.sum(x_small, axis=(1, 2, 3)),
                        rtol=1e-5, atol=1e-4)

    print("KERNEL_OK")
</pallas_src>

<mosaic_0001>
module attributes {stable_mosaic.version = 11 : i64} {
  func.func @kernel(%arg0: i32, %arg1: i32, %arg2: i32, %arg3: memref<2x8x128xf32, #tpu.memory_space<vmem>>, %arg4: memref<1x2xf32, #tpu.memory_space<smem>>, %arg5: memref<2x8x128xf32, #tpu.memory_space<vmem>>) attributes {dimension_semantics = [#tpu.dimension_semantics<parallel>, #tpu.dimension_semantics<parallel>, #tpu.dimension_semantics<arbitrary>], iteration_bounds = array<i64: 1, 1, 1>, scalar_prefetch = 0 : i64, scratch_operands = 1 : i64, tpu.core_type = #tpu.core_type<tc>, window_params = [{transform_indices = @transform_0, window_bounds = array<i64: 2, 8, 128>}, {transform_indices = @transform_1, window_bounds = array<i64: 1, 2>}]} {
    %c0_i32 = arith.constant 0 : i32
    %0 = arith.cmpi eq, %arg2, %c0_i32 : i32
    %1 = arith.extui %0 : i1 to i32
    %c0_i32_0 = arith.constant 0 : i32
    %2 = arith.cmpi ne, %1, %c0_i32_0 : i32
    scf.if %2 {
      %cst = arith.constant 0.000000e+00 : f32
      %14 = vector.broadcast %cst : f32 to vector<2x8x128xf32>
      %c0_12 = arith.constant 0 : index
      %c0_13 = arith.constant 0 : index
      %c0_14 = arith.constant 0 : index
      %15 = vector.load %arg5[%c0_12, %c0_13, %c0_14] : memref<2x8x128xf32, #tpu.memory_space<vmem>>, vector<2x8x128xf32>
      tpu.vector_store %arg5[%c0_12, %c0_13, %c0_14], %14 {strides = array<i32>} : memref<2x8x128xf32, #tpu.memory_space<vmem>>, vector<2x8x128xf32>,
    } else {
    }
    %c0_i32_1 = arith.constant 0 : i32
    %c8_i32 = arith.constant 8 : i32
    %3 = arith.muli %c0_i32_1, %c8_i32 : i32
    %c0_i32_2 = arith.constant 0 : i32
    %4 = arith.addi %3, %c0_i32_2 : i32
    %5 = tpu.assume_multiple %4, 8 : i32
    %c0 = arith.constant 0 : index
    %6 = arith.index_cast %5 : i32 to index
    %c0_3 = arith.constant 0 : index
    %7 = vector.load %arg3[%c0, %6, %c0_3] : memref<2x8x128xf32, #tpu.memory_space<vmem>>, vector<2x8x128xf32>
    %c0_4 = arith.constant 0 : index
    %c0_5 = arith.constant 0 : index
    %c0_6 = arith.constant 0 : index
    %8 = vector.load %arg5[%c0_4, %c0_5, %c0_6] : memref<2x8x128xf32, #tpu.memory_space<vmem>>, vector<2x8x128xf32>
    %9 = arith.addf %8, %7 : vector<2x8x128xf32>
    %c0_7 = arith.constant 0 : index
    %c0_8 = arith.constant 0 : index
    %c0_9 = arith.constant 0 : index
    %10 = vector.load %arg5[%c0_7, %c0_8, %c0_9] : memref<2x8x128xf32, #tpu.memory_space<vmem>>, vector<2x8x128xf32>
    tpu.vector_store %arg5[%c0_7, %c0_8, %c0_9], %9 {strides = array<i32>} : memref<2x8x128xf32, #tpu.memory_space<vmem>>, vector<2x8x128xf32>,
    %c1_i32 = arith.constant 1 : i32
    %c0_i32_10 = arith.constant 0 : i32
    %11 = arith.cmpi eq, %arg2, %c0_i32_10 : i32
    %12 = arith.extui %11 : i1 to i32
    %c0_i32_11 = arith.constant 0 : i32
    %13 = arith.cmpi ne, %12, %c0_i32_11 : i32
    scf.if %13 {
      %c0_12 = arith.constant 0 : index
      %c0_13 = arith.constant 0 : index
      %c0_14 = arith.constant 0 : index
      %14 = vector.load %arg5[%c0_12, %c0_13, %c0_14] : memref<2x8x128xf32, #tpu.memory_space<vmem>>, vector<1x8x128xf32>
      %15 = vector.shape_cast %14 : vector<1x8x128xf32> to vector<8x128xf32>
      %16 = vector.shape_cast %15 : vector<8x128xf32> to vector<1x8x128xf32>
      %cst = arith.constant dense<0.000000e+00> : vector<1xf32>
      %17 = vector.multi_reduction <add>, %16, %cst [1, 2] : vector<1x8x128xf32> to vector<1xf32>
      %18 = vector.shape_cast %17 : vector<1xf32> to vector<1x1x1xf32>
      %19 = vector.extract %18[0, 0, 0] : f32 from vector<1x1x1xf32>
      %c0_15 = arith.constant 0 : index
      %c0_16 = arith.constant 0 : index
      %20 = memref.load %arg4[%c0_15, %c0_16] : memref<1x2xf32, #tpu.memory_space<smem>>
      memref.store %19, %arg4[%c0_15, %c0_16] : memref<1x2xf32, #tpu.memory_space<smem>>
      %c1 = arith.constant 1 : index
      %c0_17 = arith.constant 0 : index
      %c0_18 = arith.constant 0 : index
      %21 = vector.load %arg5[%c1, %c0_17, %c0_18] : memref<2x8x128xf32, #tpu.memory_space<vmem>>, vector<1x8x128xf32>
      %22 = vector.shape_cast %21 : vector<1x8x128xf32> to vector<8x128xf32>
      %23 = vector.shape_cast %22 : vector<8x128xf32> to vector<1x8x128xf32>
      %cst_19 = arith.constant dense<0.000000e+00> : vector<1xf32>
      %24 = vector.multi_reduction <add>, %23, %cst_19 [1, 2] : vector<1x8x128xf32> to vector<1xf32>
      %25 = vector.shape_cast %24 : vector<1xf32> to vector<1x1x1xf32>
      %26 = vector.extract %25[0, 0, 0] : f32 from vector<1x1x1xf32>
      %c0_20 = arith.constant 0 : index
      %c1_21 = arith.constant 1 : index
      %27 = memref.load %arg4[%c0_20, %c1_21] : memref<1x2xf32, #tpu.memory_space<smem>>
      memref.store %26, %arg4[%c0_20, %c1_21] : memref<1x2xf32, #tpu.memory_space<smem>>
    } else {
    }
    return
  }
  func.func @transform_0(%arg0: i32, %arg1: i32, %arg2: i32) -> (i32, i32, i32) {
    %c1_i32 = arith.constant 1 : i32
    %0 = arith.muli %arg0, %c1_i32 : i32
    %1 = arith.addi %0, %arg2 : i32
    %c0_i32 = arith.constant 0 : i32
    %2 = arith.minsi %1, %c0_i32 : i32
    %c0_i32_0 = arith.constant 0 : i32
    %c0_i32_1 = arith.constant 0 : i32
    return %arg1, %2, %c0_i32_0 : i32, i32, i32
  }
  func.func @transform_1(%arg0: i32, %arg1: i32, %arg2: i32) -> (i32, i32) {
    %c0_i32 = arith.constant 0 : i32
    return %arg0, %arg1 : i32, i32
  }
}

</mosaic_0001>

<llo_original>
// kernel: tpu_custom_call.1
$region0: #{tpu_custom_call.1}
  #allocation0 [shape = 'u32[]', space=smem, size = 0x4, offset = 0x4, fixed_abs, tag = 'smem constant byte address 0x4 - core index']
  #allocation1 [shape = 'u32[144,128]{1,0:T(1,128)}', space=vmem, size = 0x12000, scoped, tag = 'internal scratch']
  #allocation2 [shape = 'f32[2,8,128]{2,1,0:T(8,128)}', space=vmem, size = 0x2000, scoped, tag = 'scratch operand']
  %s0 = inlined_call_operand.hbm [shape: f32[2,8,128], index: 0, kind: input, shape index: {}]
  %s1 = inlined_call_operand.hbm [shape: f32[1,2], index: 1, kind: output, shape index: {}]
  %s2 = sld [smem:[#allocation0]]
  $region26: #{tpu_custom_call.1} parent=0
    _
  %s4 = ssub.s32 1, %s2
  %s5 = scalar_select 0, %s4, %s2
  $region1: #{tpu_custom_call.1} parent=0
    #allocation3 [shape = 'u8[8192]{0}', space=vmem, size = 0x2000, scoped, tag = 'input window, operand 0, single buffered']
    #allocation4 [shape = 's32[1]{0}', space=sflag, size = 0x4, scoped, tag = 'scoped memory for tpu_custom_call.1']
    #allocation5 [shape = 's32[1]{0}', space=sflag, size = 0x4, scoped, tag = 'scoped memory for tpu_custom_call.1']
    #allocation6 [shape = 'u8[512]{0}', space=smem, size = 0x200, scoped, tag = 'output window, operand 0, single buffered']
    %6 = vsyncpa [#allocation4], 0
    %7 = vsyncpa [#allocation5], 0
    // Predicated region
    $region2: #{tpu_custom_call.1} parent=1 // pred_check
      _
    $region3: #{tpu_custom_call.1} parent=1 // pred_check_branch
      %9 = sbr.rel (0) target = $region5
    $region4: #{tpu_custom_call.1} parent=1 // pred_region
      %s10 = sadd.s32 0, 0
      %p11 = scmp.lt.s32.totalorder %s10, 0
      %s12 = scalar_select %p11, %s10, 0
      %s14 = ssub.s32 256, 256
      %15 = vsyncadd [#allocation4], %s14
      %s16 = smul.addr %s12, 128
      %s17 = scalar_lea.hbm %s0, %s16
      %s18 = sshll.u32 [#allocation3], 4
      %s19 = int_to_ptr.vmem [resolvable:$true] %s18
      %24 = dma.hbm_to_vmem [thread:$0]  %s17, 256, %s19, [#allocation4], 128, 128, 8
    $region5: #{tpu_custom_call.1} parent=1 // pred_fallthru
      _
    // Predicated region
    $region6: #{tpu_custom_call.1} parent=1 // pred_check
      _
    $region7: #{tpu_custom_call.1} parent=1 // pred_check_branch
      %26 = sbr.rel (0) target = $region9
    $region8: #{tpu_custom_call.1} parent=1 // pred_region
      %27 = dma.done [#allocation4], 256
    $region9: #{tpu_custom_call.1} parent=1 // pred_fallthru
      _
    %s28 = sadd.s32 0, 0
    %p29 = scmp.lt.s32.totalorder %s28, 0
    %s30 = scalar_select %p29, %s28, 0
    %p31 = scmp.eq.s32.totalorder 0, 0
    // Predicated region
    $region10: #{tpu_custom_call.1} parent=1 // pred_check
      %p32 = pneg %p31
    $region11: #{tpu_custom_call.1} parent=1 // pred_check_branch
      %34 = sbr.rel (%p32) target = $region13
    $region12: #{tpu_custom_call.1} parent=1 // pred_region
      %35 = vst [vmem:[#allocation2] sm:$0xff] 0.0
      %36 = vst [vmem:[#allocation2 + $0x8] sm:$0xff] 0.0
    $region13: #{tpu_custom_call.1} parent=1 // pred_fallthru
      _
    %v37 = vld [vmem:[#allocation3] sm:$0xff]
    %v38 = vld [vmem:[#allocation3 + $0x8] sm:$0xff]
    %v39 = vld [vmem:[#allocation2] sm:$0xff]
    %v40 = vld [vmem:[#allocation2 + $0x8] sm:$0xff]
    %v41 = vadd.f32 %v39, %v37
    %v42 = vadd.f32 %v40, %v38
    %43 = vst [vmem:[#allocation2] sm:$0xff] %v41
    %44 = vst [vmem:[#allocation2 + $0x8] sm:$0xff] %v42
    // Predicated region
    $region14: #{tpu_custom_call.1} parent=1 // pred_check
      %p45 = pneg %p31
    $region15: #{tpu_custom_call.1} parent=1 // pred_check_branch
      %47 = sbr.rel (%p45) target = $region17
    $region16: #{tpu_custom_call.1} parent=1 // pred_region
      %v48 = vld [vmem:[#allocation2] sm:$0xff]
      %49 = vadd.xlane.f32.xlu0 %v48
      %v50 = vpop.xlane.xlu0 %49
      %v51 = vrot.slane %v50, 4
      %v52 = vadd.f32 %v50, %v51
      %v53 = vrot.slane %v52, 2
      %v54 = vadd.f32 %v52, %v53
      %v55 = vrot.slane %v54, 1
      %v56 = vadd.f32 %v54, %v55
      %s57 = vtos %v56
      %s58 = scalar_lea.smem [#allocation6], 0
      %59 = sst [smem:[%s58]] %s57
      %s60 = scalar_lea.vmem [#allocation2], 8
      %v61 = vld [vmem:[%s60] sm:$0xff]
      %62 = vadd.xlane.f32.xlu0 %v61
      %v63 = vpop.xlane.xlu0 %62
      %v64 = vrot.slane %v63, 4
      %v65 = vadd.f32 %v63, %v64
      %v66 = vrot.slane %v65, 2
      %v67 = vadd.f32 %v65, %v66
      %v68 = vrot.slane %v67, 1
      %v69 = vadd.f32 %v67, %v68
      %s70 = vtos %v69
      %s71 = scalar_lea.smem [#allocation6], 1
      %72 = sst [smem:[%s71]] %s70
    $region17: #{tpu_custom_call.1} parent=1 // pred_fallthru
      _
    // Predicated region
    $region18: #{tpu_custom_call.1} parent=1 // pred_check
      _
    $region19: #{tpu_custom_call.1} parent=1 // pred_check_branch
      %74 = sbr.rel (0) target = $region21
    $region20: #{tpu_custom_call.1} parent=1 // pred_region
      %s76 = ssub.s32 16, 16
      %77 = vsyncadd [#allocation5], %s76
      %80 = dma.smem_to_hbm [#allocation6], 16, %s1, [#allocation5]
    $region21: #{tpu_custom_call.1} parent=1 // pred_fallthru
      _
    // Predicated region
    $region22: #{tpu_custom_call.1} parent=1 // pred_check
      _
    $region23: #{tpu_custom_call.1} parent=1 // pred_check_branch
      %82 = sbr.rel (0) target = $region25
    $region24: #{tpu_custom_call.1} parent=1 // pred_region
      %83 = dma.done [#allocation5], 16
    $region25: #{tpu_custom_call.1} parent=1 // pred_fallthru
      _
    %84 = sfence
    %85 = vsyncpa [#allocation4], 1
    %86 = vsyncpa [#allocation5], 1

</llo_original>
